<compile_context>
chip_gen: v7x
topology: tpu7x:2x2x1
jax: 0.10.0
libtpu: 0.0.40
codegen_flags: <defaults>
</compile_context>

<pallas_src>
import functools

import numpy as np
import jax
import jax.numpy as jnp
from jax.experimental import pallas as pl
from jax.experimental.pallas import tpu as pltpu

_LN_EPS = 1e-5
_MiB = 1024 * 1024


def _round_up(n, m):
    return ((n + m - 1) // m) * m


def _pad2d(a, rows, cols):
    pr, pc = rows - a.shape[0], cols - a.shape[1]
    if pr == 0 and pc == 0:
        return a
    return jnp.pad(a, ((0, pr), (0, pc)))


# ---------------------------------------------------------------------------
# Hardware-aware knobs
# ---------------------------------------------------------------------------

def _vmem_capacity_bytes():
    """Physical VMEM of the local TPU generation (conservative default: v7x)."""
    try:
        info = pltpu.get_tpu_info()
        cap = int(getattr(info, "vmem_capacity_bytes", 0) or 0)
        if cap > 0:
            return cap
    except Exception:
        pass
    return 64 * _MiB


def _vmem_cap_bytes():
    # ~85% of physical VMEM: ~108 MiB on v5e/v6e (128 MiB), ~54 MiB on v7x
    # (64 MiB) -- leaves headroom for Mosaic internal scratch / DMA descriptors.
    return max(32 * _MiB, int(_vmem_capacity_bytes() * 0.85))


_PARAM_PIPELINE_MODE_CACHE = []   # [] = unresolved, [mode] once probed


def _resolve_param_pipeline_mode():
    """Single-buffer grid-invariant parameter blocks (pl.Buffered(1)) if the
    installed Pallas supports it; verified once with a tiny probe kernel."""
    if _PARAM_PIPELINE_MODE_CACHE:
        return _PARAM_PIPELINE_MODE_CACHE[0]
    mode = None
    try:
        buffered = pl.Buffered(1)

        def _probe(x_ref, w_ref, o_ref):
            o_ref[...] = x_ref[...] + w_ref[...]

        probe = pl.pallas_call(
            _probe,
            out_shape=jax.ShapeDtypeStruct((16, 128), jnp.float32),
            grid=(2,),
            in_specs=[pl.BlockSpec((8, 128), lambda i: (i, 0)),
                      pl.BlockSpec((8, 128), lambda i: (0, 0),
                                   pipeline_mode=buffered)],
            out_specs=pl.BlockSpec((8, 128), lambda i: (i, 0)),
        )
        xp = jnp.arange(16 * 128, dtype=jnp.float32).reshape(16, 128)
        wp = jnp.full((8, 128), 2.0, jnp.float32)
        out = jax.block_until_ready(probe(xp, wp))
        if bool(jnp.allclose(out, xp + 2.0)):
            mode = buffered
    except Exception:
        mode = None
    _PARAM_PIPELINE_MODE_CACHE.append(mode)
    return mode


def _param_spec(shape, pipeline_mode):
    nd = len(shape)
    index_map = lambda i: (0,) * nd          # grid-invariant (VMEM resident)
    if pipeline_mode is not None:
        return pl.BlockSpec(shape, index_map, pipeline_mode=pipeline_mode)
    return pl.BlockSpec(shape, index_map)


# ---------------------------------------------------------------------------
# Kernel bodies
# ---------------------------------------------------------------------------

def _mish_f32(x):
    # mish(x) = x * tanh(softplus(x)) = x * (t^2 - 1) / (t^2 + 1),  t = 1 + e^x
    # -> one EUP exp + one divide instead of exp + log + tanh.  The clamp at 20
    # avoids inf/inf (for x > 20, tanh(softplus(x)) == 1 in f32 anyway); the
    # unclamped x still scales the ratio.
    e = jnp.exp(jnp.minimum(x, 20.0))
    t = 1.0 + e
    tsq = t * t
    return x * (tsq - 1.0) / (tsq + 1.0)


def _linear_ln_mish(h, w_ref, pbg_ref, d_true, eps):
    # Native-dtype operands on the MXU, f32 accumulation.
    y = jnp.dot(h, w_ref[...], preferred_element_type=jnp.float32)
    pbg = pbg_ref[...].astype(jnp.float32)        # (3, d_pad): bias, gamma, beta
    y = y + pbg[0:1, :]
    # Masked one-pass LayerNorm statistics: padded columns of y are exactly
    # zero, so sums over the padded width are the true sums; divide by the
    # true feature count.  The two reductions are independent (XLU overlap).
    inv_d = 1.0 / d_true
    s1 = jnp.sum(y, axis=-1, keepdims=True)
    s2 = jnp.sum(y * y, axis=-1, keepdims=True)
    mean = s1 * inv_d
    var = jnp.maximum(s2 * inv_d - mean * mean, 0.0)
    y = (y - mean) * jax.lax.rsqrt(var + eps)
    # gamma/beta are zero in padded columns -> padded outputs stay exactly 0.
    y = y * pbg[1:2, :] + pbg[2:3, :]
    return _mish_f32(y)


def _mlp_chunk_kernel(*refs, num_hidden, has_final, true_widths, eps, act_dtype):
    # refs = (x, [w, bias|gamma|beta slab] * num_hidden, [w_last, b_last], out)
    x_ref = refs[0]
    o_ref = refs[-1]
    h = x_ref[...].astype(act_dtype)
    idx = 1
    for l in range(num_hidden):
        w_ref, pbg_ref = refs[idx], refs[idx + 1]
        idx += 2
        # Back to the matmul dtype so the next dot stays on the fast MXU path;
        # no-op for f32.
        h = _linear_ln_mish(h, w_ref, pbg_ref, true_widths[l], eps).astype(act_dtype)
    if has_final:
        w_ref, b_ref = refs[idx], refs[idx + 1]
        out = jnp.dot(h, w_ref[...], preferred_element_type=jnp.float32)
        out = out + b_ref[...].astype(jnp.float32)
        o_ref[...] = out.astype(o_ref.dtype)
    else:
        o_ref[...] = h.astype(o_ref.dtype)


# ---------------------------------------------------------------------------
# pallas_call wrapper (one fused call per chunk of layers)
# ---------------------------------------------------------------------------

def _chunk_vmem_estimate(chunk_layers, block_m, in_p, act_itemsize, param_bufs):
    param_bytes = 0
    for l in chunk_layers:
        param_bytes += l["w"].size * np.dtype(l["w"].dtype).itemsize
        param_bytes += l["slab"].size * np.dtype(l["slab"].dtype).itemsize
    out_p = chunk_layers[-1]["out_p"]
    widths = [in_p] + [l["out_p"] for l in chunk_layers]
    act_io = 2 * block_m * (in_p * act_itemsize + out_p * 4)   # dbl-buffered I/O
    temps = 6 * block_m * max(widths) * 4                      # f32 temporaries
    return param_bufs * param_bytes + act_io + temps


def _fused_chunk_forward(h, chunk_layers, in_p, *, block_m, act_dtype, out_dtype,
                         param_mode, param_bufs, vmem_cap, eps=_LN_EPS):
    B = h.shape[0]
    has_final = chunk_layers[-1]["kind"] == "final"
    hidden_part = chunk_layers[:-1] if has_final else chunk_layers
    out_p = chunk_layers[-1]["out_p"]
    true_widths = tuple(l["d_true"] for l in hidden_part)

    args = [h]
    in_specs = [pl.BlockSpec((block_m, in_p), lambda i: (i, 0))]
    for l in chunk_layers:
        args += [l["w"], l["slab"]]
        in_specs += [_param_spec(l["w"].shape, param_mode),
                     _param_spec(l["slab"].shape, param_mode)]

    est = _chunk_vmem_estimate(chunk_layers, block_m, in_p,
                               np.dtype(act_dtype).itemsize, param_bufs)
    vmem_limit = int(min(vmem_cap, max(32 * _MiB, est + 8 * _MiB)))

    kernel = functools.partial(
        _mlp_chunk_kernel, num_hidden=len(hidden_part), has_final=has_final,
        true_widths=true_widths, eps=eps, act_dtype=act_dtype)

    return pl.pallas_call(
        kernel,
        out_shape=jax.ShapeDtypeStruct((B, out_p), out_dtype),
        grid=(pl.cdiv(B, block_m),),
        in_specs=in_specs,
        out_specs=pl.BlockSpec((block_m, out_p), lambda i: (i, 0)),
        compiler_params=pltpu.CompilerParams(
            dimension_semantics=("parallel",),
            vmem_limit_bytes=vmem_limit),
    )(*args)


# ---------------------------------------------------------------------------
# Parameters & forward
# ---------------------------------------------------------------------------

def init_mlp_params(key, input_size, hidden_sizes, output_size, dtype=jnp.float32):
    """Parameter init mirroring the PyTorch module (Linear + LayerNorm defaults).

    Linear weights are stored as (in_features, out_features) so kernels compute
    x @ W + b (== PyTorch's x @ W.T with W of shape (out, in))."""
    params = {"hidden": [], "last": None}
    in_size = input_size
    for next_size in hidden_sizes:
        key, kw, kb = jax.random.split(key, 3)
        bound = 1.0 / float(np.sqrt(in_size))
        w = jax.random.uniform(kw, (in_size, next_size), dtype, -bound, bound)
        b = jax.random.uniform(kb, (1, next_size), dtype, -bound, bound)
        gamma = jnp.ones((1, next_size), dtype)    # LayerNorm weight
        beta = jnp.zeros((1, next_size), dtype)    # LayerNorm bias
        params["hidden"].append((w, b, gamma, beta))
        in_size = next_size
    key, kw, kb = jax.random.split(key, 3)
    bound = 1.0 / float(np.sqrt(in_size))
    w = jax.random.uniform(kw, (in_size, output_size), dtype, -bound, bound)
    b = jax.random.uniform(kb, (1, output_size), dtype, -bound, bound)
    params["last"] = (w, b)
    return params


def mlp_forward(params, x, *, block_m=None, matmul_dtype=None):
    """Forward pass of the MLP as a minimal number of fused Pallas kernels.

    matmul_dtype: optionally cast activations/weights (e.g. jnp.bfloat16) for
    the MXU matmuls; accumulation and the LN/Mish epilogue stay in f32."""
    B, din = x.shape
    hidden = list(params["hidden"])
    w_last, b_last = params["last"]
    out_size = w_last.shape[1]

    vmem_cap = _vmem_cap_bytes()
    param_mode = _resolve_param_pipeline_mode()
    param_bufs = 1 if param_mode is not None else 2

    # Batch block: large tiles amortize per-grid-step overhead; 512 on
    # 128-MiB-VMEM chips (v5e/v6e), 256 on v7x.  Keep >= 2 grid steps so v7x's
    # two TensorCores both get work (extra steps are ~free on 1-TC chips).
    if block_m is None:
        block_m = 512 if vmem_cap >= 96 * _MiB else 256
    block_m = max(8, min(_round_up(block_m, 8), _round_up(B, 8)))
    while pl.cdiv(B, block_m) < 2 and block_m > 8:
        block_m = max(8, _round_up(block_m // 2, 8))

    act_dtype = np.dtype(matmul_dtype) if matmul_dtype is not None else np.dtype(x.dtype)

    # ---- lane-dense layout: pad every feature dim to a multiple of 128 ------
    din_p = _round_up(din, 128)
    x_p = _pad2d(x, B, din_p)

    layers = []
    prev_p = din_p
    for (w, b, g, be) in hidden:
        d_out = w.shape[1]
        d_out_p = _round_up(d_out, 128)
        layers.append(dict(
            kind="hidden",
            w=_pad2d(w, prev_p, d_out_p).astype(act_dtype),
            slab=_pad2d(jnp.concatenate([b, g, be], axis=0), 3, d_out_p),
            d_true=d_out, out_p=d_out_p))
        prev_p = d_out_p
    dout_p = _round_up(out_size, 128)
    layers.append(dict(
        kind="final",
        w=_pad2d(w_last, prev_p, dout_p).astype(act_dtype),
        slab=_pad2d(b_last, 1, dout_p),
        d_true=out_size, out_p=dout_p))

    # ---- greedily pack layers into chunks whose params fit the VMEM cap -----
    # Activations only touch HBM at chunk boundaries (typically 1 chunk).
    # TODO(synk): if a SINGLE layer's weights exceed the cap, tile its N/K dims
    # (stream the weight from HBM with emit_pipeline) instead of relying on the
    # vmem_limit clamp.
    chunks = []
    current, current_in_p = [], din_p
    for layer in layers:
        if current and _chunk_vmem_estimate(
                current + [layer], block_m, current_in_p,
                act_dtype.itemsize, param_bufs) > vmem_cap:
            chunks.append((current_in_p, current))
            current_in_p = current[-1]["out_p"]
            current = [layer]
        else:
            current = current + [layer]
    chunks.append((current_in_p, current))

    h = x_p
    for ci, (in_p, chunk_layers) in enumerate(chunks):
        last = ci == len(chunks) - 1
        h = _fused_chunk_forward(
            h, chunk_layers, in_p, block_m=block_m, act_dtype=act_dtype,
            out_dtype=(x.dtype if last else act_dtype),
            param_mode=param_mode, param_bufs=param_bufs, vmem_cap=vmem_cap)
    return h[:, :out_size]


def mlp_forward_ref(params, x):
    """Pure-JAX reference of the PyTorch forward pass (exact math)."""
    h = x
    for (w, b, gamma, beta) in params["hidden"]:
        y = h @ w + b
        mean = jnp.mean(y, axis=-1, keepdims=True)
        var = jnp.mean((y - mean) ** 2, axis=-1, keepdims=True)
        y = (y - mean) * jax.lax.rsqrt(var + _LN_EPS) * gamma + beta
        h = y * jnp.tanh(jax.nn.softplus(y))        # Mish
    w, b = params["last"]
    return h @ w + b


if __name__ == "__main__":
    key = jax.random.PRNGKey(0)
    kp, kx = jax.random.split(key)

    batch, input_size, hidden_sizes, output_size = 64, 16, [32, 32], 8

    params = init_mlp_params(kp, input_size, hidden_sizes, output_size)
    x = jax.random.normal(kx, (batch, input_size), jnp.float32)

    fwd = jax.jit(mlp_forward)
    out = jax.block_until_ready(fwd(params, x))
    ref = jax.block_until_ready(mlp_forward_ref(params, x))

    assert out.shape == (batch, output_size), out.shape
    max_err = float(jnp.max(jnp.abs(out - ref)))
    # Tolerance covers default-precision TPU matmul differences between the XLA
    # reference and the Mosaic kernel (both accumulate in f32); real layout /
    # LN-masking bugs would be orders of magnitude larger.
    assert jnp.allclose(out, ref, atol=1e-2, rtol=1e-2), f"max abs err={max_err}"
    print("KERNEL_OK")
</pallas_src>

<mosaic_0001>
module attributes {stable_mosaic.version = 11 : i64} {
  func.func @_mlp_chunk_kernel(%arg0: i32, %arg1: memref<32x128xf32, #tpu.memory_space<vmem>>, %arg2: memref<128x128xf32, #tpu.memory_space<vmem>>, %arg3: memref<3x128xf32, #tpu.memory_space<vmem>>, %arg4: memref<128x128xf32, #tpu.memory_space<vmem>>, %arg5: memref<3x128xf32, #tpu.memory_space<vmem>>, %arg6: memref<128x128xf32, #tpu.memory_space<vmem>>, %arg7: memref<1x128xf32, #tpu.memory_space<vmem>>, %arg8: memref<32x128xf32, #tpu.memory_space<vmem>>) attributes {dimension_semantics = [#tpu.dimension_semantics<parallel>], iteration_bounds = array<i64: 2>, scalar_prefetch = 0 : i64, scratch_operands = 0 : i64, tpu.core_type = #tpu.core_type<tc>, window_params = [{transform_indices = @transform_0, window_bounds = array<i64: 32, 128>}, {pipeline_mode = #tpu.pipeline_mode<synchronous>, transform_indices = @transform_1, window_bounds = array<i64: 128, 128>}, {pipeline_mode = #tpu.pipeline_mode<synchronous>, transform_indices = @transform_2, window_bounds = array<i64: 3, 128>}, {pipeline_mode = #tpu.pipeline_mode<synchronous>, transform_indices = @transform_3, window_bounds = array<i64: 128, 128>}, {pipeline_mode = #tpu.pipeline_mode<synchronous>, transform_indices = @transform_4, window_bounds = array<i64: 3, 128>}, {pipeline_mode = #tpu.pipeline_mode<synchronous>, transform_indices = @transform_5, window_bounds = array<i64: 128, 128>}, {pipeline_mode = #tpu.pipeline_mode<synchronous>, transform_indices = @transform_6, window_bounds = array<i64: 1, 128>}, {transform_indices = @transform_7, window_bounds = array<i64: 32, 128>}]} {
    %c0 = arith.constant 0 : index
    %c0_0 = arith.constant 0 : index
    %0 = vector.load %arg1[%c0, %c0_0] : memref<32x128xf32, #tpu.memory_space<vmem>>, vector<32x128xf32>
    %c0_1 = arith.constant 0 : index
    %c0_2 = arith.constant 0 : index
    %1 = vector.load %arg2[%c0_1, %c0_2] : memref<128x128xf32, #tpu.memory_space<vmem>>, vector<128x128xf32>
    %cst = arith.constant dense<0.000000e+00> : vector<32x128xf32>
    %2 = tpu.matmul %0, %1, %cst {dimension_numbers = #tpu.dot_dimension_numbers<[1], [0], [0], [1], [0, 0, 1, 1], [], []>} : vector<32x128xf32>, vector<128x128xf32>, vector<32x128xf32> -> vector<32x128xf32>
    %c0_3 = arith.constant 0 : index
    %c0_4 = arith.constant 0 : index
    %3 = vector.load %arg3[%c0_3, %c0_4] : memref<3x128xf32, #tpu.memory_space<vmem>>, vector<3x128xf32>
    %4 = vector.extract_strided_slice %3 {offsets = [0, 0], sizes = [1, 128], strides = [1, 1]} : vector<3x128xf32> to vector<1x128xf32>
    %5 = vector.broadcast %4 : vector<1x128xf32> to vector<32x128xf32>
    %6 = arith.addf %2, %5 : vector<32x128xf32>
    %cst_5 = arith.constant dense<0.000000e+00> : vector<32xf32>
    %7 = vector.multi_reduction <add>, %6, %cst_5 [1] : vector<32x128xf32> to vector<32xf32>
    %8 = vector.shape_cast %7 : vector<32xf32> to vector<32x1xf32>
    %9 = arith.mulf %6, %6 : vector<32x128xf32>
    %cst_6 = arith.constant dense<0.000000e+00> : vector<32xf32>
    %10 = vector.multi_reduction <add>, %9, %cst_6 [1] : vector<32x128xf32> to vector<32xf32>
    %11 = vector.shape_cast %10 : vector<32xf32> to vector<32x1xf32>
    %cst_7 = arith.constant 3.125000e-02 : f32
    %12 = vector.broadcast %cst_7 : f32 to vector<32x1xf32>
    %13 = arith.mulf %8, %12 : vector<32x1xf32>
    %cst_8 = arith.constant 3.125000e-02 : f32
    %14 = vector.broadcast %cst_8 : f32 to vector<32x1xf32>
    %15 = arith.mulf %11, %14 : vector<32x1xf32>
    %16 = arith.mulf %13, %13 : vector<32x1xf32>
    %17 = arith.subf %15, %16 : vector<32x1xf32>
    %cst_9 = arith.constant 0.000000e+00 : f32
    %18 = vector.broadcast %cst_9 : f32 to vector<32x1xf32>
    %19 = arith.maximumf %17, %18 : vector<32x1xf32>
    %20 = vector.broadcast %13 : vector<32x1xf32> to vector<32x128xf32>
    %21 = arith.subf %6, %20 : vector<32x128xf32>
    %cst_10 = arith.constant 9.99999974E-6 : f32
    %22 = vector.broadcast %cst_10 : f32 to vector<32x1xf32>
    %23 = arith.addf %19, %22 : vector<32x1xf32>
    %24 = math.rsqrt %23 : vector<32x1xf32>
    %25 = vector.broadcast %24 : vector<32x1xf32> to vector<32x128xf32>
    %26 = arith.mulf %21, %25 : vector<32x128xf32>
    %27 = vector.extract_strided_slice %3 {offsets = [1, 0], sizes = [1, 128], strides = [1, 1]} : vector<3x128xf32> to vector<1x128xf32>
    %28 = vector.broadcast %27 : vector<1x128xf32> to vector<32x128xf32>
    %29 = arith.mulf %26, %28 : vector<32x128xf32>
    %30 = vector.extract_strided_slice %3 {offsets = [2, 0], sizes = [1, 128], strides = [1, 1]} : vector<3x128xf32> to vector<1x128xf32>
    %31 = vector.broadcast %30 : vector<1x128xf32> to vector<32x128xf32>
    %32 = arith.addf %29, %31 : vector<32x128xf32>
    %cst_11 = arith.constant 2.000000e+01 : f32
    %33 = vector.broadcast %cst_11 : f32 to vector<32x128xf32>
    %34 = arith.minimumf %32, %33 : vector<32x128xf32>
    %35 = math.exp %34 : vector<32x128xf32>
    %cst_12 = arith.constant 1.000000e+00 : f32
    %36 = vector.broadcast %cst_12 : f32 to vector<32x128xf32>
    %37 = arith.addf %36, %35 : vector<32x128xf32>
    %38 = arith.mulf %37, %37 : vector<32x128xf32>
    %cst_13 = arith.constant 1.000000e+00 : f32
    %39 = vector.broadcast %cst_13 : f32 to vector<32x128xf32>
    %40 = arith.subf %38, %39 : vector<32x128xf32>
    %41 = arith.mulf %32, %40 : vector<32x128xf32>
    %cst_14 = arith.constant 1.000000e+00 : f32
    %42 = vector.broadcast %cst_14 : f32 to vector<32x128xf32>
    %43 = arith.addf %38, %42 : vector<32x128xf32>
    %44 = arith.divf %41, %43 : vector<32x128xf32>
    %c0_15 = arith.constant 0 : index
    %c0_16 = arith.constant 0 : index
    %45 = vector.load %arg4[%c0_15, %c0_16] : memref<128x128xf32, #tpu.memory_space<vmem>>, vector<128x128xf32>
    %cst_17 = arith.constant dense<0.000000e+00> : vector<32x128xf32>
    %46 = tpu.matmul %44, %45, %cst_17 {dimension_numbers = #tpu.dot_dimension_numbers<[1], [0], [0], [1], [0, 0, 1, 1], [], []>} : vector<32x128xf32>, vector<128x128xf32>, vector<32x128xf32> -> vector<32x128xf32>
    %c0_18 = arith.constant 0 : index
    %c0_19 = arith.constant 0 : index
    %47 = vector.load %arg5[%c0_18, %c0_19] : memref<3x128xf32, #tpu.memory_space<vmem>>, vector<3x128xf32>
    %48 = vector.extract_strided_slice %47 {offsets = [0, 0], sizes = [1, 128], strides = [1, 1]} : vector<3x128xf32> to vector<1x128xf32>
    %49 = vector.broadcast %48 : vector<1x128xf32> to vector<32x128xf32>
    %50 = arith.addf %46, %49 : vector<32x128xf32>
    %cst_20 = arith.constant dense<0.000000e+00> : vector<32xf32>
    %51 = vector.multi_reduction <add>, %50, %cst_20 [1] : vector<32x128xf32> to vector<32xf32>
    %52 = vector.shape_cast %51 : vector<32xf32> to vector<32x1xf32>
    %53 = arith.mulf %50, %50 : vector<32x128xf32>
    %cst_21 = arith.constant dense<0.000000e+00> : vector<32xf32>
    %54 = vector.multi_reduction <add>, %53, %cst_21 [1] : vector<32x128xf32> to vector<32xf32>
    %55 = vector.shape_cast %54 : vector<32xf32> to vector<32x1xf32>
    %cst_22 = arith.constant 3.125000e-02 : f32
    %56 = vector.broadcast %cst_22 : f32 to vector<32x1xf32>
    %57 = arith.mulf %52, %56 : vector<32x1xf32>
    %cst_23 = arith.constant 3.125000e-02 : f32
    %58 = vector.broadcast %cst_23 : f32 to vector<32x1xf32>
    %59 = arith.mulf %55, %58 : vector<32x1xf32>
    %60 = arith.mulf %57, %57 : vector<32x1xf32>
    %61 = arith.subf %59, %60 : vector<32x1xf32>
    %cst_24 = arith.constant 0.000000e+00 : f32
    %62 = vector.broadcast %cst_24 : f32 to vector<32x1xf32>
    %63 = arith.maximumf %61, %62 : vector<32x1xf32>
    %64 = vector.broadcast %57 : vector<32x1xf32> to vector<32x128xf32>
    %65 = arith.subf %50, %64 : vector<32x128xf32>
    %cst_25 = arith.constant 9.99999974E-6 : f32
    %66 = vector.broadcast %cst_25 : f32 to vector<32x1xf32>
    %67 = arith.addf %63, %66 : vector<32x1xf32>
    %68 = math.rsqrt %67 : vector<32x1xf32>
    %69 = vector.broadcast %68 : vector<32x1xf32> to vector<32x128xf32>
    %70 = arith.mulf %65, %69 : vector<32x128xf32>
    %71 = vector.extract_strided_slice %47 {offsets = [1, 0], sizes = [1, 128], strides = [1, 1]} : vector<3x128xf32> to vector<1x128xf32>
    %72 = vector.broadcast %71 : vector<1x128xf32> to vector<32x128xf32>
    %73 = arith.mulf %70, %72 : vector<32x128xf32>
    %74 = vector.extract_strided_slice %47 {offsets = [2, 0], sizes = [1, 128], strides = [1, 1]} : vector<3x128xf32> to vector<1x128xf32>
    %75 = vector.broadcast %74 : vector<1x128xf32> to vector<32x128xf32>
    %76 = arith.addf %73, %75 : vector<32x128xf32>
    %cst_26 = arith.constant 2.000000e+01 : f32
    %77 = vector.broadcast %cst_26 : f32 to vector<32x128xf32>
    %78 = arith.minimumf %76, %77 : vector<32x128xf32>
    %79 = math.exp %78 : vector<32x128xf32>
    %cst_27 = arith.constant 1.000000e+00 : f32
    %80 = vector.broadcast %cst_27 : f32 to vector<32x128xf32>
    %81 = arith.addf %80, %79 : vector<32x128xf32>
    %82 = arith.mulf %81, %81 : vector<32x128xf32>
    %cst_28 = arith.constant 1.000000e+00 : f32
    %83 = vector.broadcast %cst_28 : f32 to vector<32x128xf32>
    %84 = arith.subf %82, %83 : vector<32x128xf32>
    %85 = arith.mulf %76, %84 : vector<32x128xf32>
    %cst_29 = arith.constant 1.000000e+00 : f32
    %86 = vector.broadcast %cst_29 : f32 to vector<32x128xf32>
    %87 = arith.addf %82, %86 : vector<32x128xf32>
    %88 = arith.divf %85, %87 : vector<32x128xf32>
    %c0_30 = arith.constant 0 : index
    %c0_31 = arith.constant 0 : index
    %89 = vector.load %arg6[%c0_30, %c0_31] : memref<128x128xf32, #tpu.memory_space<vmem>>, vector<128x128xf32>
    %cst_32 = arith.constant dense<0.000000e+00> : vector<32x128xf32>
    %90 = tpu.matmul %88, %89, %cst_32 {dimension_numbers = #tpu.dot_dimension_numbers<[1], [0], [0], [1], [0, 0, 1, 1], [], []>} : vector<32x128xf32>, vector<128x128xf32>, vector<32x128xf32> -> vector<32x128xf32>
    %c0_33 = arith.constant 0 : index
    %c0_34 = arith.constant 0 : index
    %91 = vector.load %arg7[%c0_33, %c0_34] : memref<1x128xf32, #tpu.memory_space<vmem>>, vector<1x128xf32>
    %92 = vector.broadcast %91 : vector<1x128xf32> to vector<32x128xf32>
    %93 = arith.addf %90, %92 : vector<32x128xf32>
    %c0_35 = arith.constant 0 : index
    %c0_36 = arith.constant 0 : index
    %94 = vector.load %arg8[%c0_35, %c0_36] : memref<32x128xf32, #tpu.memory_space<vmem>>, vector<32x128xf32>
    tpu.vector_store %arg8[%c0_35, %c0_36], %93 {strides = array<i32>} : memref<32x128xf32, #tpu.memory_space<vmem>>, vector<32x128xf32>,
    return
  }
  func.func @transform_0(%arg0: i32) -> (i32, i32) {
    %c0_i32 = arith.constant 0 : i32
    %c0_i32_0 = arith.constant 0 : i32
    return %arg0, %c0_i32 : i32, i32
  }
  func.func @transform_1(%arg0: i32) -> (i32, i32) {
    %c0_i32 = arith.constant 0 : i32
    %c0_i32_0 = arith.constant 0 : i32
    %c0_i32_1 = arith.constant 0 : i32
    return %c0_i32, %c0_i32_0 : i32, i32
  }
  func.func @transform_2(%arg0: i32) -> (i32, i32) {
    %c0_i32 = arith.constant 0 : i32
    %c0_i32_0 = arith.constant 0 : i32
    %c0_i32_1 = arith.constant 0 : i32
    return %c0_i32, %c0_i32_0 : i32, i32
  }
  func.func @transform_3(%arg0: i32) -> (i32, i32) {
    %c0_i32 = arith.constant 0 : i32
    %c0_i32_0 = arith.constant 0 : i32
    %c0_i32_1 = arith.constant 0 : i32
    return %c0_i32, %c0_i32_0 : i32, i32
  }
  func.func @transform_4(%arg0: i32) -> (i32, i32) {
    %c0_i32 = arith.constant 0 : i32
    %c0_i32_0 = arith.constant 0 : i32
    %c0_i32_1 = arith.constant 0 : i32
    return %c0_i32, %c0_i32_0 : i32, i32
  }
  func.func @transform_5(%arg0: i32) -> (i32, i32) {
    %c0_i32 = arith.constant 0 : i32
    %c0_i32_0 = arith.constant 0 : i32
    %c0_i32_1 = arith.constant 0 : i32
    return %c0_i32, %c0_i32_0 : i32, i32
  }
  func.func @transform_6(%arg0: i32) -> (i32, i32) {
    %c0_i32 = arith.constant 0 : i32
    %c0_i32_0 = arith.constant 0 : i32
    %c0_i32_1 = arith.constant 0 : i32
    return %c0_i32, %c0_i32_0 : i32, i32
  }
  func.func @transform_7(%arg0: i32) -> (i32, i32) {
    %c0_i32 = arith.constant 0 : i32
    %c0_i32_0 = arith.constant 0 : i32
    return %arg0, %c0_i32 : i32, i32
  }
}

</mosaic_0001>

<llo_original>
// kernel: mlp_forward.1
$region0: #{mlp_forward.1}
  #allocation0 [shape = 'u32[]', space=smem, size = 0x4, offset = 0x4, fixed_abs, tag = 'smem constant byte address 0x4 - core index']
  #allocation1 [shape = 'u32[144,128]{1,0:T(1,128)}', space=vmem, size = 0x12000, scoped, tag = 'internal scratch']
  %s0 = inlined_call_operand.vmem [shape: f32[64,128], index: 0, kind: input, shape index: {}]
  %s1 = inlined_call_operand.vmem [shape: f32[128,128], index: 1, kind: input, shape index: {}]
  %s2 = inlined_call_operand.vmem [shape: f32[3,128], index: 2, kind: input, shape index: {}]
  %s3 = inlined_call_operand.vmem [shape: f32[128,128], index: 3, kind: input, shape index: {}]
  %s4 = inlined_call_operand.vmem [shape: f32[3,128], index: 4, kind: input, shape index: {}]
  %s5 = inlined_call_operand.vmem [shape: f32[128,128], index: 5, kind: input, shape index: {}]
  %s6 = inlined_call_operand.vmem [shape: f32[1,128], index: 6, kind: input, shape index: {}]
  %s7 = inlined_call_operand.vmem [shape: f32[64,128], index: 7, kind: output, shape index: {}]
  %s8 = sld [smem:[#allocation0]]
  $region61: #{mlp_forward.1} parent=0
    _
  %s10 = ssub.s32 1, %s8
  %s11 = scalar_select 0, %s10, %s8
  loop: start=0, step=1, limit=4
  $region2: #{mlp_forward.1} parent=0 // loop_pre_header
    _
  $region3: #{mlp_forward.1} parent=0 // loop_header
    %s13 = sphi 0, %s17
    %p14 = scmp.ge.s32.totalorder %s13, 4
    %s23 = sphi 0, %s25
    %s26 = sphi 0, %s23
    %s27 = sphi 0, %s26
    %s43 = sphi 0, %s27
    %s47 = sphi 0, %s47
    %s49 = sphi 0, %s47
    %s50 = sphi 0, %s49
    %s64 = sphi 0, %s50
    %s68 = sphi 0, %s68
    %s70 = sphi 0, %s68
    %s71 = sphi 0, %s70
    %s85 = sphi 0, %s71
    %s89 = sphi 0, %s89
    %s91 = sphi 0, %s89
    %s92 = sphi 0, %s91
    %s106 = sphi 0, %s92
    %s110 = sphi 0, %s110
    %s112 = sphi 0, %s110
    %s113 = sphi 0, %s112
    %s127 = sphi 0, %s113
    %s131 = sphi 0, %s131
    %s133 = sphi 0, %s131
    %s134 = sphi 0, %s133
    %s148 = sphi 0, %s134
    %s152 = sphi 0, %s152
    %s154 = sphi 0, %s152
    %s155 = sphi 0, %s154
    %s169 = sphi 0, %s155
    %s175 = sphi 0, %s177
    %s178 = sphi 0, %s175
    %s179 = sphi 0, %s178
    %s195 = sphi 0, %s179
  $region4: #{mlp_forward.1} parent=0 // loop_header_branch
    %16 = sbr.rel (%p14) target = $region8
  $region5: #{mlp_forward.1} parent=0 // loop_body
    %s18 = ssub.s32 %s13, 1
    %s19 = ssub.s32 %s13, 2
    %s20 = sadd.s32 %s13, 1
    %s21 = ssub.s32 %s13, %s20
    %p22 = scmp.eq.s32.totalorder %s21, 0
    %s24 = sadd.s32 %s23, 1
    %s25 = scalar_select %p22, %s23, %s24
    %p28 = pneg %p22
    %p29 = scmp.eq.s32.totalorder %s13, 1
    %p30 = por %p28, %p29
    %p31 = scmp.ne.s32.totalorder %s23, %s26
    %p32 = scmp.eq.s32.totalorder %s13, 0
    %p33 = por %p31, %p32
    %p34 = scmp.ne.s32.totalorder %s23, %s26
    %p35 = scmp.eq.s32.totalorder %s18, 1
    %p36 = por %p34, %p35
    %p37 = scmp.ne.s32.totalorder %s26, %s27
    %p38 = scmp.eq.s32.totalorder %s18, 0
    %p39 = por %p37, %p38
    %p40 = scmp.ne.s32.totalorder %s26, %s27
    %p41 = scmp.eq.s32.totalorder %s19, 1
    %p42 = por %p40, %p41
    %p44 = scmp.ne.s32.totalorder %s27, %s43
    %p45 = scmp.eq.s32.totalorder %s19, 0
    %p46 = por %p44, %p45
    %s48 = sadd.s32 %s47, 1
    %p51 = scmp.eq.s32.totalorder %s13, 1
    %p52 = scmp.ne.s32.totalorder %s47, %s49
    %p53 = scmp.eq.s32.totalorder %s13, 0
    %p54 = por %p52, %p53
    %p55 = scmp.ne.s32.totalorder %s47, %s49
    %p56 = scmp.eq.s32.totalorder %s18, 1
    %p57 = por %p55, %p56
    %p58 = scmp.ne.s32.totalorder %s49, %s50
    %p59 = scmp.eq.s32.totalorder %s18, 0
    %p60 = por %p58, %p59
    %p61 = scmp.ne.s32.totalorder %s49, %s50
    %p62 = scmp.eq.s32.totalorder %s19, 1
    %p63 = por %p61, %p62
    %p65 = scmp.ne.s32.totalorder %s50, %s64
    %p66 = scmp.eq.s32.totalorder %s19, 0
    %p67 = por %p65, %p66
    %s69 = sadd.s32 %s68, 1
    %p72 = scmp.eq.s32.totalorder %s13, 1
    %p73 = scmp.ne.s32.totalorder %s68, %s70
    %p74 = scmp.eq.s32.totalorder %s13, 0
    %p75 = por %p73, %p74
    %p76 = scmp.ne.s32.totalorder %s68, %s70
    %p77 = scmp.eq.s32.totalorder %s18, 1
    %p78 = por %p76, %p77
    %p79 = scmp.ne.s32.totalorder %s70, %s71
    %p80 = scmp.eq.s32.totalorder %s18, 0
    %p81 = por %p79, %p80
    %p82 = scmp.ne.s32.totalorder %s70, %s71
    %p83 = scmp.eq.s32.totalorder %s19, 1
    %p84 = por %p82, %p83
    %p86 = scmp.ne.s32.totalorder %s71, %s85
    %p87 = scmp.eq.s32.totalorder %s19, 0
    %p88 = por %p86, %p87
    %s90 = sadd.s32 %s89, 1
    %p93 = scmp.eq.s32.totalorder %s13, 1
    %p94 = scmp.ne.s32.totalorder %s89, %s91
    %p95 = scmp.eq.s32.totalorder %s13, 0
    %p96 = por %p94, %p95
    %p97 = scmp.ne.s32.totalorder %s89, %s91
    %p98 = scmp.eq.s32.totalorder %s18, 1
    %p99 = por %p97, %p98
    %p100 = scmp.ne.s32.totalorder %s91, %s92
    %p101 = scmp.eq.s32.totalorder %s18, 0
    %p102 = por %p100, %p101
    %p103 = scmp.ne.s32.totalorder %s91, %s92
    %p104 = scmp.eq.s32.totalorder %s19, 1
    %p105 = por %p103, %p104
    %p107 = scmp.ne.s32.totalorder %s92, %s106
    %p108 = scmp.eq.s32.totalorder %s19, 0
    %p109 = por %p107, %p108
    %s111 = sadd.s32 %s110, 1
    %p114 = scmp.eq.s32.totalorder %s13, 1
    %p115 = scmp.ne.s32.totalorder %s110, %s112
    %p116 = scmp.eq.s32.totalorder %s13, 0
    %p117 = por %p115, %p116
    %p118 = scmp.ne.s32.totalorder %s110, %s112
    %p119 = scmp.eq.s32.totalorder %s18, 1
    %p120 = por %p118, %p119
    %p121 = scmp.ne.s32.totalorder %s112, %s113
    %p122 = scmp.eq.s32.totalorder %s18, 0
    %p123 = por %p121, %p122
    %p124 = scmp.ne.s32.totalorder %s112, %s113
    %p125 = scmp.eq.s32.totalorder %s19, 1
    %p126 = por %p124, %p125
    %p128 = scmp.ne.s32.totalorder %s113, %s127
    %p129 = scmp.eq.s32.totalorder %s19, 0
    %p130 = por %p128, %p129
    %s132 = sadd.s32 %s131, 1
    %p135 = scmp.eq.s32.totalorder %s13, 1
    %p136 = scmp.ne.s32.totalorder %s131, %s133
    %p137 = scmp.eq.s32.totalorder %s13, 0
    %p138 = por %p136, %p137
    %p139 = scmp.ne.s32.totalorder %s131, %s133
    %p140 = scmp.eq.s32.totalorder %s18, 1
    %p141 = por %p139, %p140
    %p142 = scmp.ne.s32.totalorder %s133, %s134
    %p143 = scmp.eq.s32.totalorder %s18, 0
    %p144 = por %p142, %p143
    %p145 = scmp.ne.s32.totalorder %s133, %s134
    %p146 = scmp.eq.s32.totalorder %s19, 1
    %p147 = por %p145, %p146
    %p149 = scmp.ne.s32.totalorder %s134, %s148
    %p150 = scmp.eq.s32.totalorder %s19, 0
    %p151 = por %p149, %p150
    %s153 = sadd.s32 %s152, 1
    %p156 = scmp.eq.s32.totalorder %s13, 1
    %p157 = scmp.ne.s32.totalorder %s152, %s154
    %p158 = scmp.eq.s32.totalorder %s13, 0
    %p159 = por %p157, %p158
    %p160 = scmp.ne.s32.totalorder %s152, %s154
    %p161 = scmp.eq.s32.totalorder %s18, 1
    %p162 = por %p160, %p161
    %p163 = scmp.ne.s32.totalorder %s154, %s155
    %p164 = scmp.eq.s32.totalorder %s18, 0
    %p165 = por %p163, %p164
    %p166 = scmp.ne.s32.totalorder %s154, %s155
    %p167 = scmp.eq.s32.totalorder %s19, 1
    %p168 = por %p166, %p167
    %p170 = scmp.ne.s32.totalorder %s155, %s169
    %p171 = scmp.eq.s32.totalorder %s19, 0
    %p172 = por %p170, %p171
    %s173 = ssub.s32 %s13, %s20
    %p174 = scmp.eq.s32.totalorder %s173, 0
    %s176 = sadd.s32 %s175, 1
    %s177 = scalar_select %p174, %s175, %s176
    %p180 = pneg %p174
    %p181 = scmp.eq.s32.totalorder %s13, 1
    %p182 = por %p180, %p181
    %p183 = scmp.ne.s32.totalorder %s175, %s178
    %p184 = scmp.eq.s32.totalorder %s13, 0
    %p185 = por %p183, %p184
    %p186 = scmp.ne.s32.totalorder %s175, %s178
    %p187 = scmp.eq.s32.totalorder %s18, 1
    %p188 = por %p186, %p187
    %p189 = scmp.ne.s32.totalorder %s178, %s179
    %p190 = scmp.eq.s32.totalorder %s18, 0
    %p191 = por %p189, %p190
    %p192 = scmp.ne.s32.totalorder %s178, %s179
    %p193 = scmp.eq.s32.totalorder %s19, 1
    %p194 = por %p192, %p193
    %p196 = scmp.ne.s32.totalorder %s179, %s195
    %p197 = scmp.eq.s32.totalorder %s19, 0
    %p198 = por %p196, %p197
    %p199 = scmp.le.s32.totalorder 1, %s13
    %p200 = scmp.lt.s32.totalorder %s13, 3
    %p201 = pnand %p199, %p200
    %p202 = pneg %p201
    // Predicated region
    $region9: #{mlp_forward.1} parent=5 // pred_check
      _
    $region10: #{mlp_forward.1} parent=5 // pred_check_branch
      %204 = sbr.rel (%p201) target = $region12
    $region11: #{mlp_forward.1} parent=5 // pred_region
      %s205 = ssub.s32 %s13, 1
      // Predicated region
      $region13: #{mlp_forward.1} parent=11 // pred_check
        %p206 = pneg %p60
      $region14: #{mlp_forward.1} parent=11 // pred_check_branch
        %208 = sbr.rel (%p206) target = $region16
      $region15: #{mlp_forward.1} parent=11 // pred_region
        _
      $region16: #{mlp_forward.1} parent=11 // pred_fallthru
        _
      // Predicated region
      $region17: #{mlp_forward.1} parent=11 // pred_check
        %p209 = pneg %p81
      $region18: #{mlp_forward.1} parent=11 // pred_check_branch
        %211 = sbr.rel (%p209) target = $region20
      $region19: #{mlp_forward.1} parent=11 // pred_region
        _
      $region20: #{mlp_forward.1} parent=11 // pred_fallthru
        _
      // Predicated region
      $region21: #{mlp_forward.1} parent=11 // pred_check
        %p212 = pneg %p102
      $region22: #{mlp_forward.1} parent=11 // pred_check_branch
        %214 = sbr.rel (%p212) target = $region24
      $region23: #{mlp_forward.1} parent=11 // pred_region
        _
      $region24: #{mlp_forward.1} parent=11 // pred_fallthru
        _
      // Predicated region
      $region25: #{mlp_forward.1} parent=11 // pred_check
        %p215 = pneg %p123
      $region26: #{mlp_forward.1} parent=11 // pred_check_branch
        %217 = sbr.rel (%p215) target = $region28
      $region27: #{mlp_forward.1} parent=11 // pred_region
        _
      $region28: #{mlp_forward.1} parent=11 // pred_fallthru
        _
      // Predicated region
      $region29: #{mlp_forward.1} parent=11 // pred_check
        %p218 = pneg %p144
      $region30: #{mlp_forward.1} parent=11 // pred_check_branch
        %220 = sbr.rel (%p218) target = $region32
      $region31: #{mlp_forward.1} parent=11 // pred_region
        _
      $region32: #{mlp_forward.1} parent=11 // pred_fallthru
        _
      // Predicated region
      $region33: #{mlp_forward.1} parent=11 // pred_check
        %p221 = pneg %p165
      $region34: #{mlp_forward.1} parent=11 // pred_check_branch
        %223 = sbr.rel (%p221) target = $region36
      $region35: #{mlp_forward.1} parent=11 // pred_region
        _
      $region36: #{mlp_forward.1} parent=11 // pred_fallthru
        _
    $region12: #{mlp_forward.1} parent=5 // pred_fallthru
      _
    %p224 = scmp.lt.s32.totalorder %s13, 2
    // Predicated region
    $region37: #{mlp_forward.1} parent=5 // pred_check
      %p225 = pneg %p224
    $region38: #{mlp_forward.1} parent=5 // pred_check_branch
      %227 = sbr.rel (%p225) target = $region40
    $region39: #{mlp_forward.1} parent=5 // pred_region
      // Predicated region
      $region41: #{mlp_forward.1} parent=39 // pred_check
        %p228 = pneg %p33
      $region42: #{mlp_forward.1} parent=39 // pred_check_branch
        %230 = sbr.rel (%p228) target = $region44
      $region43: #{mlp_forward.1} parent=39 // pred_region
        %s231 = smul.u32 4, %s13
        %p232 = scmp.lt.s32.totalorder %s231, 7
        %s233 = scalar_select %p232, %s231, 7
        %s234 = smul.addr %s233, 8
        %s235 = scalar_lea.vmem %s0, %s234
        %s236 = smul.u32 4, %s13
      $region44: #{mlp_forward.1} parent=39 // pred_fallthru
        _
    $region40: #{mlp_forward.1} parent=5 // pred_fallthru
      _
    %p237 = scmp.le.s32.totalorder 1, %s13
    %p238 = scmp.lt.s32.totalorder %s13, 3
    %p239 = pnand %p237, %p238
    %p240 = pneg %p239
    // Predicated region
    $region45: #{mlp_forward.1} parent=5 // pred_check
      _
    $region46: #{mlp_forward.1} parent=5 // pred_check_branch
      %242 = sbr.rel (%p239) target = $region48
    $region47: #{mlp_forward.1} parent=5 // pred_region
      %s243 = ssub.s32 %s13, 1
      %s244 = smul.u32 4, %s18
      %p245 = scmp.lt.s32.totalorder %s244, 7
      %s246 = scalar_select %p245, %s244, 7
      %s247 = smul.addr %s246, 8
      %s248 = scalar_lea.vmem %s0, %s247
      %p249 = pneg %p39
      %p250 = pneg %p36
      %p251 = pneg %p60
      %p252 = pneg %p57
      %p253 = pneg %p81
      %p254 = pneg %p78
      %p255 = pneg %p102
      %p256 = pneg %p99
      %p257 = pneg %p123
      %p258 = pneg %p120
      %p259 = pneg %p144
      %p260 = pneg %p141
      %p261 = pneg %p165
      %p262 = pneg %p162
      %p263 = pneg %p191
      %p264 = pneg %p188
      %s265 = smul.u32 4, %s18
      %p266 = scmp.lt.s32.totalorder %s265, 7
      %s267 = scalar_select %p266, %s265, 7
      %s268 = smul.addr %s267, 8
      %s269 = scalar_lea.vmem %s7, %s268
      %s270 = smul.u32 4, %s18
      %p271 = scmp.lt.s32.totalorder %s270, 7
      %s272 = scalar_select %p271, %s270, 7
      %s273 = smul.addr %s272, 8
      %s274 = scalar_lea.vmem %s0, %s273
      %s275 = smul.u32 4, %s18
      %s276 = smul.u32 4, %s18
      %p277 = scmp.lt.s32.totalorder %s276, 7
      %s278 = scalar_select %p277, %s276, 7
      %s279 = smul.addr %s278, 8
      %s280 = scalar_lea.vmem %s7, %s279
      %s281 = smul.u32 4, %s18
      %v282 = vld [vmem:[%s274] sm:$0xff]
      %v283 = vld [vmem:[%s274 + $0x8] sm:$0xff]
      %v284 = vld [vmem:[%s274 + $0x10] sm:$0xff]
      %v285 = vld [vmem:[%s274 + $0x18] sm:$0xff]
      %v286 = vld [vmem:[%s1] sm:$0xff]
      %v287 = vld [vmem:[%s1 + $0x8] sm:$0xff]
      %v288 = vld [vmem:[%s1 + $0x10] sm:$0xff]
      %v289 = vld [vmem:[%s1 + $0x18] sm:$0xff]
      %v290 = vld [vmem:[%s1 + $0x20] sm:$0xff]
      %v291 = vld [vmem:[%s1 + $0x28] sm:$0xff]
      %v292 = vld [vmem:[%s1 + $0x30] sm:$0xff]
      %v293 = vld [vmem:[%s1 + $0x38] sm:$0xff]
      %v294 = vld [vmem:[%s1 + $0x40] sm:$0xff]
      %v295 = vld [vmem:[%s1 + $0x48] sm:$0xff]
      %v296 = vld [vmem:[%s1 + $0x50] sm:$0xff]
      %v297 = vld [vmem:[%s1 + $0x58] sm:$0xff]
      %v298 = vld [vmem:[%s1 + $0x60] sm:$0xff]
      %v299 = vld [vmem:[%s1 + $0x68] sm:$0xff]
      %v300 = vld [vmem:[%s1 + $0x70] sm:$0xff]
      %v301 = vld [vmem:[%s1 + $0x78] sm:$0xff]
      %v302 = vld [vmem:[%s2] sm:$0x7]
      %v303 = vlaneseq
      %v304 = vshrl.u32 %v303, 7
      %v305 = vsub.s32 0, %v304
      %v306 = vrot.slane %v302, %v305
      %307 = vmatprep.subr.mxu0 0.0
      %308 = vmatpush1.msra.mxu0 %v286
      %309 = vmatprep.subr.mxu0 0.0
      %310 = vmatpush1.msra.mxu0 %v287
      %311 = vmatprep.subr.mxu0 0.0
      %312 = vmatpush1.msra.mxu0 %v288
      %313 = vmatprep.subr.mxu0 0.0
      %314 = vmatpush1.msra.mxu0 %v289
      %315 = vmatprep.subr.mxu0 0.0
      %316 = vmatpush1.msra.mxu0 %v290
      %317 = vmatprep.subr.mxu0 0.0
      %318 = vmatpush1.msra.mxu0 %v291
      %319 = vmatprep.subr.mxu0 0.0
      %320 = vmatpush1.msra.mxu0 %v292
      %321 = vmatprep.subr.mxu0 0.0
      %322 = vmatpush1.msra.mxu0 %v293
      %323 = vmatprep.subr.mxu0 0.0
      %324 = vmatpush1.msra.mxu0 %v294
      %325 = vmatprep.subr.mxu0 0.0
      %326 = vmatpush1.msra.mxu0 %v295
      %327 = vmatprep.subr.mxu0 0.0
      %328 = vmatpush1.msra.mxu0 %v296
      %329 = vmatprep.subr.mxu0 0.0
      %330 = vmatpush1.msra.mxu0 %v297
      %331 = vmatprep.subr.mxu0 0.0
      %332 = vmatpush1.msra.mxu0 %v298
      %333 = vmatprep.subr.mxu0 0.0
      %334 = vmatpush1.msra.mxu0 %v299
      %335 = vmatprep.subr.mxu0 0.0
      %336 = vmatpush1.msra.mxu0 %v300
      %337 = vmatprep.subr.mxu0 0.0
      %338 = vmatpush1.msra.mxu0 %v301
      %339 = vmatprep.subr.mxu0 0.0
      %340 = vmatpush1.msra.mxu0 0.0
      %341 = vmatprep.subr.mxu0 0.0
      %342 = vmatpush1.msra.mxu0 0.0
      %343 = vmatprep.subr.mxu0 0.0
      %344 = vmatpush1.msra.mxu0 0.0
      %345 = vmatprep.subr.mxu0 0.0
      %346 = vmatpush1.msra.mxu0 0.0
      %347 = vmatprep.subr.mxu0 0.0
      %348 = vmatpush1.msra.mxu0 0.0
      %349 = vmatprep.subr.mxu0 0.0
      %350 = vmatpush1.msra.mxu0 0.0
      %351 = vmatprep.subr.mxu0 0.0
      %352 = vmatpush1.msra.mxu0 0.0
      %353 = vmatprep.subr.mxu0 0.0
      %354 = vmatpush1.msra.mxu0 0.0
      %355 = vmatprep.subr.mxu0 0.0
      %356 = vmatpush1.msra.mxu0 0.0
      %357 = vmatprep.subr.mxu0 0.0
      %358 = vmatpush1.msra.mxu0 0.0
      %359 = vmatprep.subr.mxu0 0.0
      %360 = vmatpush1.msra.mxu0 0.0
      %361 = vmatprep.subr.mxu0 0.0
      %362 = vmatpush1.msra.mxu0 0.0
      %363 = vmatprep.subr.mxu0 0.0
      %364 = vmatpush1.msra.mxu0 0.0
      %365 = vmatprep.subr.mxu0 0.0
      %366 = vmatpush1.msra.mxu0 0.0
      %367 = vmatprep.subr.mxu0 0.0
      %368 = vmatpush1.msra.mxu0 0.0
      %369 = vmatprep.subr.mxu0 0.0
      %370 = vmatpush1.msra.mxu0 0.0
      %371 = vmatprep.mubr.f32.mxu0 0.0
      %372 = vmatmul.mubr.f32.gmra.mrb[0].mxu0 %v282
      %v373 = vpop.f32.mrb[0].mxu0
      %v374 = vadd.f32 %v306, %v373
      %v375 = vpop.f32.mrb[0].mxu0
      %376 = vmatprep.mubr.f32.mxu0 0.0
      %377 = vmatmul.mubr.f32.gmra.mrb[0].mxu0 %v283
      %v378 = vpop.f32.mrb[0].mxu0
      %v379 = vadd.f32 %v306, %v378
      %v380 = vpop.f32.mrb[0].mxu0
      %381 = vmatprep.mubr.f32.mxu0 0.0
      %382 = vmatmul.mubr.f32.gmra.mrb[0].mxu0 %v284
      %v383 = vpop.f32.mrb[0].mxu0
      %v384 = vadd.f32 %v306, %v383
      %v385 = vpop.f32.mrb[0].mxu0
      %386 = vmatprep.mubr.f32.mxu0 0.0
      %387 = vmatmul.mubr.f32.gmra.mrb[0].mxu0 %v285
      %v388 = vpop.f32.mrb[0].mxu0
      %v389 = vadd.f32 %v306, %v388
      %v390 = vpop.f32.mrb[0].mxu0
      %391 = vdwg.mxu0
      %392 = vadd.xlane.f32.xlu0 %v374
      %v393 = vpop.xlane.xlu0 %392
      %394 = vadd.xlane.f32.xlu0 %v379
      %v395 = vpop.xlane.xlu0 %394
      %396 = vadd.xlane.f32.xlu0 %v384
      %v397 = vpop.xlane.xlu0 %396
      %398 = vadd.xlane.f32.xlu0 %v389
      %v399 = vpop.xlane.xlu0 %398
      %v400 = vmul.f32 %v374, %v374
      %v401 = vmul.f32 %v379, %v379
      %v402 = vmul.f32 %v384, %v384
      %v403 = vmul.f32 %v389, %v389
      %404 = vadd.xlane.f32.xlu0 %v400
      %v405 = vpop.xlane.xlu0 %404
      %406 = vadd.xlane.f32.xlu0 %v401
      %v407 = vpop.xlane.xlu0 %406
      %408 = vadd.xlane.f32.xlu0 %v402
      %v409 = vpop.xlane.xlu0 %408
      %410 = vadd.xlane.f32.xlu0 %v403
      %v411 = vpop.xlane.xlu0 %410
      %v412 = vmul.f32 %v393, 0.03125
      %v413 = vmul.f32 %v395, 0.03125
      %v414 = vmul.f32 %v397, 0.03125
      %v415 = vmul.f32 %v399, 0.03125
      %v416 = vmul.f32 %v405, 0.03125
      %v417 = vmul.f32 %v407, 0.03125
      %v418 = vmul.f32 %v409, 0.03125
      %v419 = vmul.f32 %v411, 0.03125
      %v420 = vmul.f32 %v412, %v412
      %v421 = vmul.f32 %v413, %v413
      %v422 = vmul.f32 %v414, %v414
      %v423 = vmul.f32 %v415, %v415
      %v424 = vsub.f32 %v416, %v420
      %v425 = vsub.f32 %v417, %v421
      %v426 = vsub.f32 %v418, %v422
      %v427 = vsub.f32 %v419, %v423
      %v428 = vmax.f32 %v424, 0.0
      %v429 = vmax.f32 %v425, 0.0
      %v430 = vmax.f32 %v426, 0.0
      %v431 = vmax.f32 %v427, 0.0
      %v432 = vsub.f32 %v374, %v412
      %v433 = vsub.f32 %v379, %v413
      %v434 = vsub.f32 %v384, %v414
      %v435 = vsub.f32 %v389, %v415
      %v436 = vadd.f32 %v428, 1e-05
      %v437 = vadd.f32 %v429, 1e-05
      %v438 = vadd.f32 %v430, 1e-05
      %v439 = vadd.f32 %v431, 1e-05
      %v440 = vrsqrt.pop %v436
      %v441 = vrsqrt.pop %v437
      %v442 = vrsqrt.pop %v438
      %v443 = vrsqrt.pop %v439
      %v444 = vmul.f32 %v432, %v440
      %v445 = vmul.f32 %v433, %v441
      %v446 = vmul.f32 %v434, %v442
      %v447 = vmul.f32 %v435, %v443
      %v448 = vlaneseq
      %v449 = vshrl.u32 %v448, 7
      %v450 = vsub.s32 1, %v449
      %v451 = vrot.slane %v302, %v450
      %v452 = vmul.f32 %v444, %v451
      %v453 = vmul.f32 %v445, %v451
      %v454 = vmul.f32 %v446, %v451
      %v455 = vmul.f32 %v447, %v451
      %v456 = vlaneseq
      %v457 = vshrl.u32 %v456, 7
      %v458 = vsub.s32 2, %v457
      %v459 = vrot.slane %v302, %v458
      %v460 = vadd.f32 %v452, %v459
      %v461 = vadd.f32 %v453, %v459
      %v462 = vadd.f32 %v454, %v459
      %v463 = vadd.f32 %v455, %v459
      %v464 = vmin.f32 %v460, 20.0
      %v465 = vmin.f32 %v461, 20.0
      %v466 = vmin.f32 %v462, 20.0
      %v467 = vmin.f32 %v463, 20.0
      %v468 = vmul.f32 %v464, 1.442695
      %v469 = vpow.pop %v468
      %v470 = vmul.f32 %v465, 1.442695
      %v471 = vpow.pop %v470
      %v472 = vmul.f32 %v466, 1.442695
      %v473 = vpow.pop %v472
      %v474 = vmul.f32 %v467, 1.442695
      %v475 = vpow.pop %v474
      %v476 = vadd.f32 %v469, 1.0
      %v477 = vadd.f32 %v471, 1.0
      %v478 = vadd.f32 %v473, 1.0
      %v479 = vadd.f32 %v475, 1.0
      %v480 = vmul.f32 %v476, %v476
      %v481 = vmul.f32 %v477, %v477
      %v482 = vmul.f32 %v478, %v478
      %v483 = vmul.f32 %v479, %v479
      %v484 = vsub.f32 %v480, 1.0
      %v485 = vsub.f32 %v481, 1.0
      %v486 = vsub.f32 %v482, 1.0
      %v487 = vsub.f32 %v483, 1.0
      %v488 = vmul.f32 %v460, %v484
      %v489 = vmul.f32 %v461, %v485
      %v490 = vmul.f32 %v462, %v486
      %v491 = vmul.f32 %v463, %v487
      %v492 = vadd.f32 %v480, 1.0
      %v493 = vadd.f32 %v481, 1.0
      %v494 = vadd.f32 %v482, 1.0
      %v495 = vadd.f32 %v483, 1.0
      %v496 = vrcp.pop %v492
      %v497 = vmul.f32 %v488, %v496
      %v498 = vrcp.pop %v493
      %v499 = vmul.f32 %v489, %v498
      %v500 = vrcp.pop %v494
      %v501 = vmul.f32 %v490, %v500
      %v502 = vrcp.pop %v495
      %v503 = vmul.f32 %v491, %v502
      %v504 = vld [vmem:[%s3] sm:$0xff]
      %v505 = vld [vmem:[%s3 + $0x8] sm:$0xff]
      %v506 = vld [vmem:[%s3 + $0x10] sm:$0xff]
      %v507 = vld [vmem:[%s3 + $0x18] sm:$0xff]
      %v508 = vld [vmem:[%s3 + $0x20] sm:$0xff]
      %v509 = vld [vmem:[%s3 + $0x28] sm:$0xff]
      %v510 = vld [vmem:[%s3 + $0x30] sm:$0xff]
      %v511 = vld [vmem:[%s3 + $0x38] sm:$0xff]
      %v512 = vld [vmem:[%s3 + $0x40] sm:$0xff]
      %v513 = vld [vmem:[%s3 + $0x48] sm:$0xff]
      %v514 = vld [vmem:[%s3 + $0x50] sm:$0xff]
      %v515 = vld [vmem:[%s3 + $0x58] sm:$0xff]
      %v516 = vld [vmem:[%s3 + $0x60] sm:$0xff]
      %v517 = vld [vmem:[%s3 + $0x68] sm:$0xff]
      %v518 = vld [vmem:[%s3 + $0x70] sm:$0xff]
      %v519 = vld [vmem:[%s3 + $0x78] sm:$0xff]
      %v520 = vld [vmem:[%s4] sm:$0x7]
      %v521 = vlaneseq
      %v522 = vshrl.u32 %v521, 7
      %v523 = vsub.s32 0, %v522
      %v524 = vrot.slane %v520, %v523
      %525 = vmatprep.subr.mxu0 0.0
      %526 = vmatpush1.msra.mxu0 %v504
      %527 = vmatprep.subr.mxu0 0.0
      %528 = vmatpush1.msra.mxu0 %v505
      %529 = vmatprep.subr.mxu0 0.0
      %530 = vmatpush1.msra.mxu0 %v506
      %531 = vmatprep.subr.mxu0 0.0
      %532 = vmatpush1.msra.mxu0 %v507
      %533 = vmatprep.subr.mxu0 0.0
      %534 = vmatpush1.msra.mxu0 %v508
      %535 = vmatprep.subr.mxu0 0.0
      %536 = vmatpush1.msra.mxu0 %v509
      %537 = vmatprep.subr.mxu0 0.0
      %538 = vmatpush1.msra.mxu0 %v510
      %539 = vmatprep.subr.mxu0 0.0
      %540 = vmatpush1.msra.mxu0 %v511
      %541 = vmatprep.subr.mxu0 0.0
      %542 = vmatpush1.msra.mxu0 %v512
      %543 = vmatprep.subr.mxu0 0.0
      %544 = vmatpush1.msra.mxu0 %v513
      %545 = vmatprep.subr.mxu0 0.0
      %546 = vmatpush1.msra.mxu0 %v514
      %547 = vmatprep.subr.mxu0 0.0
      %548 = vmatpush1.msra.mxu0 %v515
      %549 = vmatprep.subr.mxu0 0.0
      %550 = vmatpush1.msra.mxu0 %v516
      %551 = vmatprep.subr.mxu0 0.0
      %552 = vmatpush1.msra.mxu0 %v517
      %553 = vmatprep.subr.mxu0 0.0
      %554 = vmatpush1.msra.mxu0 %v518
      %555 = vmatprep.subr.mxu0 0.0
      %556 = vmatpush1.msra.mxu0 %v519
      %557 = vmatprep.subr.mxu0 0.0
      %558 = vmatpush1.msra.mxu0 0.0
      %559 = vmatprep.subr.mxu0 0.0
      %560 = vmatpush1.msra.mxu0 0.0
      %561 = vmatprep.subr.mxu0 0.0
      %562 = vmatpush1.msra.mxu0 0.0
      %563 = vmatprep.subr.mxu0 0.0
      %564 = vmatpush1.msra.mxu0 0.0
      %565 = vmatprep.subr.mxu0 0.0
      %566 = vmatpush1.msra.mxu0 0.0
      %567 = vmatprep.subr.mxu0 0.0
      %568 = vmatpush1.msra.mxu0 0.0
      %569 = vmatprep.subr.mxu0 0.0
      %570 = vmatpush1.msra.mxu0 0.0
      %571 = vmatprep.subr.mxu0 0.0
      %572 = vmatpush1.msra.mxu0 0.0
      %573 = vmatprep.subr.mxu0 0.0
      %574 = vmatpush1.msra.mxu0 0.0
      %575 = vmatprep.subr.mxu0 0.0
      %576 = vmatpush1.msra.mxu0 0.0
      %577 = vmatprep.subr.mxu0 0.0
      %578 = vmatpush1.msra.mxu0 0.0
      %579 = vmatprep.subr.mxu0 0.0
      %580 = vmatpush1.msra.mxu0 0.0
      %581 = vmatprep.subr.mxu0 0.0
      %582 = vmatpush1.msra.mxu0 0.0
      %583 = vmatprep.subr.mxu0 0.0
      %584 = vmatpush1.msra.mxu0 0.0
      %585 = vmatprep.subr.mxu0 0.0
      %586 = vmatpush1.msra.mxu0 0.0
      %587 = vmatprep.subr.mxu0 0.0
      %588 = vmatpush1.msra.mxu0 0.0
      %589 = vmatprep.mubr.f32.mxu0 0.0
      %590 = vmatmul.mubr.f32.gmra.mrb[0].mxu0 %v497
      %v591 = vpop.f32.mrb[0].mxu0
      %v592 = vadd.f32 %v524, %v591
      %v593 = vpop.f32.mrb[0].mxu0
      %594 = vmatprep.mubr.f32.mxu0 0.0
      %595 = vmatmul.mubr.f32.gmra.mrb[0].mxu0 %v499
      %v596 = vpop.f32.mrb[0].mxu0
      %v597 = vadd.f32 %v524, %v596
      %v598 = vpop.f32.mrb[0].mxu0
      %599 = vmatprep.mubr.f32.mxu0 0.0
      %600 = vmatmul.mubr.f32.gmra.mrb[0].mxu0 %v501
      %v601 = vpop.f32.mrb[0].mxu0
      %v602 = vadd.f32 %v524, %v601
      %v603 = vpop.f32.mrb[0].mxu0
      %604 = vmatprep.mubr.f32.mxu0 0.0
      %605 = vmatmul.mubr.f32.gmra.mrb[0].mxu0 %v503
      %v606 = vpop.f32.mrb[0].mxu0
      %v607 = vadd.f32 %v524, %v606
      %v608 = vpop.f32.mrb[0].mxu0
      %609 = vdwg.mxu0
      %610 = vadd.xlane.f32.xlu0 %v592
      %v611 = vpop.xlane.xlu0 %610
      %612 = vadd.xlane.f32.xlu0 %v597
      %v613 = vpop.xlane.xlu0 %612
      %614 = vadd.xlane.f32.xlu0 %v602
      %v615 = vpop.xlane.xlu0 %614
      %616 = vadd.xlane.f32.xlu0 %v607
      %v617 = vpop.xlane.xlu0 %616
      %v618 = vmul.f32 %v592, %v592
      %v619 = vmul.f32 %v597, %v597
      %v620 = vmul.f32 %v602, %v602
      %v621 = vmul.f32 %v607, %v607
      %622 = vadd.xlane.f32.xlu0 %v618
      %v623 = vpop.xlane.xlu0 %622
      %624 = vadd.xlane.f32.xlu0 %v619
      %v625 = vpop.xlane.xlu0 %624
      %626 = vadd.xlane.f32.xlu0 %v620
      %v627 = vpop.xlane.xlu0 %626
      %628 = vadd.xlane.f32.xlu0 %v621
      %v629 = vpop.xlane.xlu0 %628
      %v630 = vmul.f32 %v611, 0.03125
      %v631 = vmul.f32 %v613, 0.03125
      %v632 = vmul.f32 %v615, 0.03125
      %v633 = vmul.f32 %v617, 0.03125
      %v634 = vmul.f32 %v623, 0.03125
      %v635 = vmul.f32 %v625, 0.03125
      %v636 = vmul.f32 %v627, 0.03125
      %v637 = vmul.f32 %v629, 0.03125
      %v638 = vmul.f32 %v630, %v630
      %v639 = vmul.f32 %v631, %v631
      %v640 = vmul.f32 %v632, %v632
      %v641 = vmul.f32 %v633, %v633
      %v642 = vsub.f32 %v634, %v638
      %v643 = vsub.f32 %v635, %v639
      %v644 = vsub.f32 %v636, %v640
      %v645 = vsub.f32 %v637, %v641
      %v646 = vmax.f32 %v642, 0.0
      %v647 = vmax.f32 %v643, 0.0
      %v648 = vmax.f32 %v644, 0.0
      %v649 = vmax.f32 %v645, 0.0
      %v650 = vsub.f32 %v592, %v630
      %v651 = vsub.f32 %v597, %v631
      %v652 = vsub.f32 %v602, %v632
      %v653 = vsub.f32 %v607, %v633
      %v654 = vadd.f32 %v646, 1e-05
      %v655 = vadd.f32 %v647, 1e-05
      %v656 = vadd.f32 %v648, 1e-05
      %v657 = vadd.f32 %v649, 1e-05
      %v658 = vrsqrt.pop %v654
      %v659 = vrsqrt.pop %v655
      %v660 = vrsqrt.pop %v656
      %v661 = vrsqrt.pop %v657
      %v662 = vmul.f32 %v650, %v658
      %v663 = vmul.f32 %v651, %v659
      %v664 = vmul.f32 %v652, %v660
      %v665 = vmul.f32 %v653, %v661
      %v666 = vlaneseq
      %v667 = vshrl.u32 %v666, 7
      %v668 = vsub.s32 1, %v667
      %v669 = vrot.slane %v520, %v668
      %v670 = vmul.f32 %v662, %v669
      %v671 = vmul.f32 %v663, %v669
      %v672 = vmul.f32 %v664, %v669
      %v673 = vmul.f32 %v665, %v669
      %v674 = vlaneseq
      %v675 = vshrl.u32 %v674, 7
      %v676 = vsub.s32 2, %v675
      %v677 = vrot.slane %v520, %v676
      %v678 = vadd.f32 %v670, %v677
      %v679 = vadd.f32 %v671, %v677
      %v680 = vadd.f32 %v672, %v677
      %v681 = vadd.f32 %v673, %v677
      %v682 = vmin.f32 %v678, 20.0
      %v683 = vmin.f32 %v679, 20.0
      %v684 = vmin.f32 %v680, 20.0
      %v685 = vmin.f32 %v681, 20.0
      %v686 = vmul.f32 %v682, 1.442695
      %v687 = vpow.pop %v686
      %v688 = vmul.f32 %v683, 1.442695
      %v689 = vpow.pop %v688
      %v690 = vmul.f32 %v684, 1.442695
      %v691 = vpow.pop %v690
      %v692 = vmul.f32 %v685, 1.442695
      %v693 = vpow.pop %v692
      %v694 = vadd.f32 %v687, 1.0
      %v695 = vadd.f32 %v689, 1.0
      %v696 = vadd.f32 %v691, 1.0
      %v697 = vadd.f32 %v693, 1.0
      %v698 = vmul.f32 %v694, %v694
      %v699 = vmul.f32 %v695, %v695
      %v700 = vmul.f32 %v696, %v696
      %v701 = vmul.f32 %v697, %v697
      %v702 = vsub.f32 %v698, 1.0
      %v703 = vsub.f32 %v699, 1.0
      %v704 = vsub.f32 %v700, 1.0
      %v705 = vsub.f32 %v701, 1.0
      %v706 = vmul.f32 %v678, %v702
      %v707 = vmul.f32 %v679, %v703
      %v708 = vmul.f32 %v680, %v704
      %v709 = vmul.f32 %v681, %v705
      %v710 = vadd.f32 %v698, 1.0
      %v711 = vadd.f32 %v699, 1.0
      %v712 = vadd.f32 %v700, 1.0
      %v713 = vadd.f32 %v701, 1.0
      %v714 = vrcp.pop %v710
      %v715 = vmul.f32 %v706, %v714
      %v716 = vrcp.pop %v711
      %v717 = vmul.f32 %v707, %v716
      %v718 = vrcp.pop %v712
      %v719 = vmul.f32 %v708, %v718
      %v720 = vrcp.pop %v713
      %v721 = vmul.f32 %v709, %v720
      %v722 = vld [vmem:[%s5] sm:$0xff]
      %v723 = vld [vmem:[%s5 + $0x8] sm:$0xff]
      %v724 = vld [vmem:[%s5 + $0x10] sm:$0xff]
      %v725 = vld [vmem:[%s5 + $0x18] sm:$0xff]
      %v726 = vld [vmem:[%s5 + $0x20] sm:$0xff]
      %v727 = vld [vmem:[%s5 + $0x28] sm:$0xff]
      %v728 = vld [vmem:[%s5 + $0x30] sm:$0xff]
      %v729 = vld [vmem:[%s5 + $0x38] sm:$0xff]
      %v730 = vld [vmem:[%s5 + $0x40] sm:$0xff]
      %v731 = vld [vmem:[%s5 + $0x48] sm:$0xff]
      %v732 = vld [vmem:[%s5 + $0x50] sm:$0xff]
      %v733 = vld [vmem:[%s5 + $0x58] sm:$0xff]
      %v734 = vld [vmem:[%s5 + $0x60] sm:$0xff]
      %v735 = vld [vmem:[%s5 + $0x68] sm:$0xff]
      %v736 = vld [vmem:[%s5 + $0x70] sm:$0xff]
      %v737 = vld [vmem:[%s5 + $0x78] sm:$0xff]
      %v738 = vld [vmem:[%s6] sm:$0x1]
      %v740 = vlaneseq
      %v741 = vshrl.u32 %v740, 7
      %v742 = vsub.s32 0, %v741
      %v743 = vrot.slane %v738, %v742
      %745 = vmatprep.subr.mxu0 0.0
      %746 = vmatpush1.msra.mxu0 %v722
      %747 = vmatprep.subr.mxu0 0.0
      %748 = vmatpush1.msra.mxu0 %v723
      %749 = vmatprep.subr.mxu0 0.0
      %750 = vmatpush1.msra.mxu0 %v724
      %751 = vmatprep.subr.mxu0 0.0
      %752 = vmatpush1.msra.mxu0 %v725
      %753 = vmatprep.subr.mxu0 0.0
      %754 = vmatpush1.msra.mxu0 %v726
      %755 = vmatprep.subr.mxu0 0.0
      %756 = vmatpush1.msra.mxu0 %v727
      %757 = vmatprep.subr.mxu0 0.0
      %758 = vmatpush1.msra.mxu0 %v728
      %759 = vmatprep.subr.mxu0 0.0
      %760 = vmatpush1.msra.mxu0 %v729
      %761 = vmatprep.subr.mxu0 0.0
      %762 = vmatpush1.msra.mxu0 %v730
      %763 = vmatprep.subr.mxu0 0.0
      %764 = vmatpush1.msra.mxu0 %v731
      %765 = vmatprep.subr.mxu0 0.0
      %766 = vmatpush1.msra.mxu0 %v732
      %767 = vmatprep.subr.mxu0 0.0
      %768 = vmatpush1.msra.mxu0 %v733
      %769 = vmatprep.subr.mxu0 0.0
      %770 = vmatpush1.msra.mxu0 %v734
      %771 = vmatprep.subr.mxu0 0.0
      %772 = vmatpush1.msra.mxu0 %v735
      %773 = vmatprep.subr.mxu0 0.0
      %774 = vmatpush1.msra.mxu0 %v736
      %775 = vmatprep.subr.mxu0 0.0
      %776 = vmatpush1.msra.mxu0 %v737
      %777 = vmatprep.subr.mxu0 0.0
      %778 = vmatpush1.msra.mxu0 0.0
      %779 = vmatprep.subr.mxu0 0.0
      %780 = vmatpush1.msra.mxu0 0.0
      %781 = vmatprep.subr.mxu0 0.0
      %782 = vmatpush1.msra.mxu0 0.0
      %783 = vmatprep.subr.mxu0 0.0
      %784 = vmatpush1.msra.mxu0 0.0
      %785 = vmatprep.subr.mxu0 0.0
      %786 = vmatpush1.msra.mxu0 0.0
      %787 = vmatprep.subr.mxu0 0.0
      %788 = vmatpush1.msra.mxu0 0.0
      %789 = vmatprep.subr.mxu0 0.0
      %790 = vmatpush1.msra.mxu0 0.0
      %791 = vmatprep.subr.mxu0 0.0
      %792 = vmatpush1.msra.mxu0 0.0
      %793 = vmatprep.subr.mxu0 0.0
      %794 = vmatpush1.msra.mxu0 0.0
      %795 = vmatprep.subr.mxu0 0.0
      %796 = vmatpush1.msra.mxu0 0.0
      %797 = vmatprep.subr.mxu0 0.0
      %798 = vmatpush1.msra.mxu0 0.0
      %799 = vmatprep.subr.mxu0 0.0
      %800 = vmatpush1.msra.mxu0 0.0
      %801 = vmatprep.subr.mxu0 0.0
      %802 = vmatpush1.msra.mxu0 0.0
      %803 = vmatprep.subr.mxu0 0.0
      %804 = vmatpush1.msra.mxu0 0.0
      %805 = vmatprep.subr.mxu0 0.0
      %806 = vmatpush1.msra.mxu0 0.0
      %807 = vmatprep.subr.mxu0 0.0
      %808 = vmatpush1.msra.mxu0 0.0
      %809 = vmatprep.mubr.f32.mxu0 0.0
      %810 = vmatmul.mubr.f32.gmra.mrb[0].mxu0 %v715
      %v811 = vpop.f32.mrb[0].mxu0
      %v812 = vadd.f32 %v743, %v811
      %v813 = vpop.f32.mrb[0].mxu0
      %814 = vmatprep.mubr.f32.mxu0 0.0
      %815 = vmatmul.mubr.f32.gmra.mrb[0].mxu0 %v717
      %v816 = vpop.f32.mrb[0].mxu0
      %v817 = vadd.f32 %v743, %v816
      %v818 = vpop.f32.mrb[0].mxu0
      %819 = vmatprep.mubr.f32.mxu0 0.0
      %820 = vmatmul.mubr.f32.gmra.mrb[0].mxu0 %v719
      %v821 = vpop.f32.mrb[0].mxu0
      %v822 = vadd.f32 %v743, %v821
      %v823 = vpop.f32.mrb[0].mxu0
      %824 = vmatprep.mubr.f32.mxu0 0.0
      %825 = vmatmul.mubr.f32.gmra.mrb[0].mxu0 %v721
      %v826 = vpop.f32.mrb[0].mxu0
      %v827 = vadd.f32 %v743, %v826
      %v828 = vpop.f32.mrb[0].mxu0
      %829 = vdwg.mxu0
      %830 = vst [vmem:[%s280] sm:$0xff] %v812
      %831 = vst [vmem:[%s280 + $0x8] sm:$0xff] %v817
      %832 = vst [vmem:[%s280 + $0x10] sm:$0xff] %v822
      %833 = vst [vmem:[%s280 + $0x18] sm:$0xff] %v827
      %s834 = smul.u32 4, %s18
      %p835 = scmp.lt.s32.totalorder %s834, 7
      %s836 = scalar_select %p835, %s834, 7
      %s837 = smul.addr %s836, 8
      %s838 = scalar_lea.vmem %s7, %s837
      // Predicated region
      $region49: #{mlp_forward.1} parent=47 // pred_check
        %p839 = pneg %p188
      $region50: #{mlp_forward.1} parent=47 // pred_check_branch
        %841 = sbr.rel (%p839) target = $region52
      $region51: #{mlp_forward.1} parent=47 // pred_region
        %s842 = smul.u32 4, %s18
      $region52: #{mlp_forward.1} parent=47 // pred_fallthru
        _
    $region48: #{mlp_forward.1} parent=5 // pred_fallthru
      _
    %p843 = scmp.le.s32.totalorder 2, %s13
    // Predicated region
    $region53: #{mlp_forward.1} parent=5 // pred_check
      %p844 = pneg %p843
    $region54: #{mlp_forward.1} parent=5 // pred_check_branch
      %846 = sbr.rel (%p844) target = $region56
    $region55: #{mlp_forward.1} parent=5 // pred_region
      %s847 = ssub.s32 %s13, 2
      // Predicated region
      $region57: #{mlp_forward.1} parent=55 // pred_check
        %p848 = pneg %p194
      $region58: #{mlp_forward.1} parent=55 // pred_check_branch
        %850 = sbr.rel (%p848) target = $region60
      $region59: #{mlp_forward.1} parent=55 // pred_region
        %s851 = smul.u32 4, %s19
        %p852 = scmp.lt.s32.totalorder %s851, 7
        %s853 = scalar_select %p852, %s851, 7
        %s854 = smul.addr %s853, 8
        %s855 = scalar_lea.vmem %s7, %s854
      $region60: #{mlp_forward.1} parent=55 // pred_fallthru
        _
    $region56: #{mlp_forward.1} parent=5 // pred_fallthru
      _
  $region6: #{mlp_forward.1} parent=0 // loop_footer
    %s17 = sadd.s32 1, %s13
  $region7: #{mlp_forward.1} parent=0 // loop_footer_branch
    %12 = sbr.rel target = $region3
  $region8: #{mlp_forward.1} parent=0 // loop_exit
    _

</llo_original>
